<compile_context>
chip_gen: v7x
topology: tpu7x:2x2x1
jax: 0.10.0
libtpu: 0.0.40
codegen_flags: <defaults>
</compile_context>

<pallas_src>
import functools

import jax
import jax.numpy as jnp
from jax import lax
from jax.experimental import pallas as pl
from jax.experimental.pallas import tpu as pltpu


def _self_attention_kernel(x_full_ref, x_tile_ref, w_qv_ref, b_qv_ref,
                           w_k_ref, b_k_ref, gamma_ref,
                           out_ref, attn_ref, qv_ref, *, c8p):
    j = pl.program_id(1)

    # ---- once per batch element: fused [q; v] projection, kept resident ----
    @pl.when(j == 0)
    def _():
        x_full = x_full_ref[0].astype(jnp.float32)                    # (C, N)
        qv = jnp.dot(w_qv_ref[...], x_full,
                     preferred_element_type=jnp.float32) + b_qv_ref[...]
        qv_ref[...] = qv.astype(qv_ref.dtype)                         # bf16

    # ---- per j-tile ---------------------------------------------------------
    x_t = x_tile_ref[0].astype(jnp.float32)                           # (C, tj)

    # Key projection for this tile only (tiny matmul, padded to c8p sublanes).
    k_t = (jnp.dot(w_k_ref[...], x_t, preferred_element_type=jnp.float32)
           + b_k_ref[...]).astype(jnp.bfloat16)                       # (c8p, tj)

    q = qv_ref[0:c8p, :]                                              # (c8p, N) bf16
    v = qv_ref[c8p:, :]                                               # (C,   N) bf16

    # s_t[j, i] = k_j . q_i  -- score matrix computed pre-transposed; padded
    # channels are zero in both operands so they contribute nothing.
    s_t = lax.dot_general(k_t, q, (((0,), (0,)), ((), ())),
                          preferred_element_type=jnp.float32)         # (tj, N)

    # nn.Softmax(dim=-2) on S == softmax over the last axis of S^T, which is
    # exactly the returned attention_map.  Softmax math in f32.
    s_max = jnp.max(s_t, axis=-1, keepdims=True)
    e = jnp.exp(s_t - s_max)
    denom = jnp.sum(e, axis=-1, keepdims=True)
    attn = e * pl.reciprocal(denom, approx=True)                      # (tj, N)

    # o[c, j] = sum_i v[c, i] * attention_map[j, i]
    o = lax.dot_general(v, attn.astype(jnp.bfloat16),
                        (((1,), (1,)), ((), ())),
                        preferred_element_type=jnp.float32)           # (C, tj)

    gamma = gamma_ref[0]                                              # SMEM scalar
    out_ref[0] = (x_t + gamma * o).astype(out_ref.dtype)
    attn_ref[0] = attn.astype(attn_ref.dtype)


def _pick_tile(n):
    for t in (512, 256, 128):
        if n % t == 0:
            return t
    return n  # full dim (always legal as a block size)


def self_attention_pallas(x_nchw, wq, wk, wv, bq, bk, bv, gamma):
    """x_nchw: (B, C, H, W).  Conv-style weights: wq/wk (C//8, C), wv (C, C).

    Returns (out_nchw, attention_map) matching the PyTorch module.
    """
    B, C, H, W = x_nchw.shape
    C8 = wq.shape[0]
    N = H * W

    # Free reshape -- kernel works in (B, C, N); no transposes in the wrapper.
    x_cn = x_nchw.reshape(B, C, N)

    # Pad the narrow q/k channel axis up to a bf16-sublane-friendly multiple.
    c8p = -(-C8 // 16) * 16
    pad = c8p - C8
    wq_p = jnp.pad(wq, ((0, pad), (0, 0)))
    wk_p = jnp.pad(wk, ((0, pad), (0, 0)))
    bq_p = jnp.pad(bq, ((0, pad),))
    bk_p = jnp.pad(bk, ((0, pad),))

    w_qv = jnp.concatenate([wq_p, wv], axis=0)              # (c8p + C, C)
    b_qv = jnp.concatenate([bq_p, bv], axis=0)[:, None]     # (c8p + C, 1)
    w_k = wk_p                                              # (c8p, C)
    b_k = bk_p[:, None]                                     # (c8p, 1)
    gamma1 = gamma.reshape(1).astype(jnp.float32)

    tj = _pick_tile(N)
    nj = N // tj

    grid_spec = pltpu.PrefetchScalarGridSpec(
        num_scalar_prefetch=0,
        grid=(B, nj),
        in_specs=[
            pl.BlockSpec((1, C, N), lambda b, j: (b, 0, 0)),       # x full (resident)
            pl.BlockSpec((1, C, tj), lambda b, j: (b, 0, j)),      # x j-tile
            pl.BlockSpec((c8p + C, C), lambda b, j: (0, 0)),       # fused [Wq; Wv]
            pl.BlockSpec((c8p + C, 1), lambda b, j: (0, 0)),       # fused [bq; bv]
            pl.BlockSpec((c8p, C), lambda b, j: (0, 0)),           # Wk (padded)
            pl.BlockSpec((c8p, 1), lambda b, j: (0, 0)),           # bk (padded)
            pl.BlockSpec(memory_space=pltpu.MemorySpace.SMEM),     # gamma
        ],
        out_specs=[
            pl.BlockSpec((1, C, tj), lambda b, j: (b, 0, j)),      # out (B, C, N)
            pl.BlockSpec((1, tj, N), lambda b, j: (b, j, 0)),      # attention_map
        ],
        scratch_shapes=[pltpu.VMEM((c8p + C, N), jnp.bfloat16)],   # resident [q; v]
    )

    kernel = functools.partial(_self_attention_kernel, c8p=c8p)

    out_cn, attn = pl.pallas_call(
        kernel,
        out_shape=(
            jax.ShapeDtypeStruct((B, C, N), x_nchw.dtype),
            jax.ShapeDtypeStruct((B, N, N), jnp.float32),
        ),
        grid_spec=grid_spec,
        compiler_params=pltpu.CompilerParams(
            dimension_semantics=("parallel", "arbitrary"),
            vmem_limit_bytes=64 * 1024 * 1024,
        ),
    )(x_cn, x_cn, w_qv, b_qv, w_k, b_k, gamma1)

    return out_cn.reshape(B, C, H, W), attn


def self_attention_ref(x, wq, wk, wv, bq, bk, bv, gamma):
    """Pure-JAX reference mirroring the PyTorch forward exactly (f32)."""
    B, C, H, W = x.shape
    N = H * W
    x_cn = x.reshape(B, C, N)
    q = jnp.einsum('oc,bcn->bon', wq, x_cn) + bq[None, :, None]   # (B, C8, N)
    k = jnp.einsum('oc,bcn->bon', wk, x_cn) + bk[None, :, None]   # (B, C8, N)
    v = jnp.einsum('oc,bcn->bon', wv, x_cn) + bv[None, :, None]   # (B, C,  N)
    proj_query = jnp.transpose(q, (0, 2, 1))                      # (B, N, C8)
    s = jnp.einsum('bic,bcj->bij', proj_query, k)                 # S[b, i, j]
    attn_t = jax.nn.softmax(s, axis=-2)                           # Softmax(dim=-2)
    attn_map = jnp.transpose(attn_t, (0, 2, 1))                   # returned map
    o = jnp.einsum('bci,bij->bcj', v, attn_t)                     # (B, C, N)
    out = x + gamma[0] * o.reshape(B, C, H, W)
    return out, attn_map


if __name__ == "__main__":
    key = jax.random.PRNGKey(0)
    B, C, H, W = 2, 32, 8, 8                 # in_dim=32 -> query/key dim = 4
    C8 = C // 8

    k_x, k_q, k_k, k_v, k_bq, k_bk, k_bv = jax.random.split(key, 7)
    x = jax.random.normal(k_x, (B, C, H, W), dtype=jnp.float32)
    wq = jax.random.normal(k_q, (C8, C), dtype=jnp.float32) * 0.1   # conv-style (out, in)
    wk = jax.random.normal(k_k, (C8, C), dtype=jnp.float32) * 0.1
    wv = jax.random.normal(k_v, (C, C), dtype=jnp.float32) * 0.1
    bq = jax.random.normal(k_bq, (C8,), dtype=jnp.float32) * 0.1
    bk = jax.random.normal(k_bk, (C8,), dtype=jnp.float32) * 0.1
    bv = jax.random.normal(k_bv, (C,), dtype=jnp.float32) * 0.1
    # nn.Parameter(torch.zeros(1)) -> gamma = 0 by default; use a nonzero value
    # so the attention path is actually exercised.
    gamma = jnp.array([0.5], dtype=jnp.float32)

    out, attn = jax.jit(self_attention_pallas)(x, wq, wk, wv, bq, bk, bv, gamma)
    jax.block_until_ready((out, attn))

    out_ref, attn_ref = self_attention_ref(x, wq, wk, wv, bq, bk, bv, gamma)
    assert out.shape == (B, C, H, W)
    assert attn.shape == (B, H * W, H * W)
    # Tolerances account for the bf16 MXU path + approx reciprocal in-kernel.
    assert jnp.allclose(out, out_ref, atol=1e-2, rtol=1e-2), (
        float(jnp.max(jnp.abs(out - out_ref))))
    assert jnp.allclose(attn, attn_ref, atol=5e-3, rtol=5e-2), (
        float(jnp.max(jnp.abs(attn - attn_ref))))

    print("KERNEL_OK")
</pallas_src>

<mosaic_0001>
module attributes {stable_mosaic.version = 11 : i64} {
  func.func @_self_attention_kernel(%arg0: i32, %arg1: i32, %arg2: memref<1x32x64xf32, #tpu.memory_space<vmem>>, %arg3: memref<1x32x64xf32, #tpu.memory_space<vmem>>, %arg4: memref<48x32xf32, #tpu.memory_space<vmem>>, %arg5: memref<48x1xf32, #tpu.memory_space<vmem>>, %arg6: memref<16x32xf32, #tpu.memory_space<vmem>>, %arg7: memref<16x1xf32, #tpu.memory_space<vmem>>, %arg8: memref<1xf32, #tpu.memory_space<smem>>, %arg9: memref<1x32x64xf32, #tpu.memory_space<vmem>>, %arg10: memref<1x64x64xf32, #tpu.memory_space<vmem>>, %arg11: memref<48x64xbf16, #tpu.memory_space<vmem>>) attributes {dimension_semantics = [#tpu.dimension_semantics<parallel>, #tpu.dimension_semantics<arbitrary>], iteration_bounds = array<i64: 2, 1>, scalar_prefetch = 0 : i64, scratch_operands = 1 : i64, tpu.core_type = #tpu.core_type<tc>, window_params = [{transform_indices = @transform_0, window_bounds = array<i64: 1, 32, 64>}, {transform_indices = @transform_1, window_bounds = array<i64: 1, 32, 64>}, {pipeline_mode = #tpu.pipeline_mode<synchronous>, transform_indices = @transform_2, window_bounds = array<i64: 48, 32>}, {pipeline_mode = #tpu.pipeline_mode<synchronous>, transform_indices = @transform_3, window_bounds = array<i64: 48, 1>}, {pipeline_mode = #tpu.pipeline_mode<synchronous>, transform_indices = @transform_4, window_bounds = array<i64: 16, 32>}, {pipeline_mode = #tpu.pipeline_mode<synchronous>, transform_indices = @transform_5, window_bounds = array<i64: 16, 1>}, {transform_indices = @transform_6, window_bounds = array<i64: 1>}, {transform_indices = @transform_7, window_bounds = array<i64: 1, 32, 64>}, {transform_indices = @transform_8, window_bounds = array<i64: 1, 64, 64>}]} {
    %c0_i32 = arith.constant 0 : i32
    %0 = arith.cmpi eq, %arg1, %c0_i32 : i32
    %1 = arith.extui %0 : i1 to i32
    %c0_i32_0 = arith.constant 0 : i32
    %2 = arith.cmpi ne, %1, %c0_i32_0 : i32
    scf.if %2 {
      %c0_21 = arith.constant 0 : index
      %c0_22 = arith.constant 0 : index
      %c0_23 = arith.constant 0 : index
      %36 = vector.load %arg2[%c0_21, %c0_22, %c0_23] : memref<1x32x64xf32, #tpu.memory_space<vmem>>, vector<1x32x64xf32>
      %37 = vector.shape_cast %36 : vector<1x32x64xf32> to vector<32x64xf32>
      %c0_24 = arith.constant 0 : index
      %c0_25 = arith.constant 0 : index
      %38 = vector.load %arg4[%c0_24, %c0_25] : memref<48x32xf32, #tpu.memory_space<vmem>>, vector<48x32xf32>
      %cst_26 = arith.constant dense<0.000000e+00> : vector<48x64xf32>
      %39 = tpu.matmul %38, %37, %cst_26 {dimension_numbers = #tpu.dot_dimension_numbers<[1], [0], [0], [1], [0, 0, 1, 1], [], []>} : vector<48x32xf32>, vector<32x64xf32>, vector<48x64xf32> -> vector<48x64xf32>
      %c0_27 = arith.constant 0 : index
      %c0_28 = arith.constant 0 : index
      %40 = vector.load %arg5[%c0_27, %c0_28] : memref<48x1xf32, #tpu.memory_space<vmem>>, vector<48x1xf32>
      %41 = vector.broadcast %40 : vector<48x1xf32> to vector<48x64xf32>
      %42 = arith.addf %39, %41 : vector<48x64xf32>
      %43 = arith.truncf %42 : vector<48x64xf32> to vector<48x64xbf16>
      %c0_29 = arith.constant 0 : index
      %c0_30 = arith.constant 0 : index
      %44 = vector.load %arg11[%c0_29, %c0_30] : memref<48x64xbf16, #tpu.memory_space<vmem>>, vector<48x64xbf16>
      tpu.vector_store %arg11[%c0_29, %c0_30], %43 {strides = array<i32>} : memref<48x64xbf16, #tpu.memory_space<vmem>>, vector<48x64xbf16>,
    } else {
    }
    %c0 = arith.constant 0 : index
    %c0_1 = arith.constant 0 : index
    %c0_2 = arith.constant 0 : index
    %3 = vector.load %arg3[%c0, %c0_1, %c0_2] : memref<1x32x64xf32, #tpu.memory_space<vmem>>, vector<1x32x64xf32>
    %4 = vector.shape_cast %3 : vector<1x32x64xf32> to vector<32x64xf32>
    %c0_3 = arith.constant 0 : index
    %c0_4 = arith.constant 0 : index
    %5 = vector.load %arg6[%c0_3, %c0_4] : memref<16x32xf32, #tpu.memory_space<vmem>>, vector<16x32xf32>
    %cst = arith.constant dense<0.000000e+00> : vector<16x64xf32>
    %6 = tpu.matmul %5, %4, %cst {dimension_numbers = #tpu.dot_dimension_numbers<[1], [0], [0], [1], [0, 0, 1, 1], [], []>} : vector<16x32xf32>, vector<32x64xf32>, vector<16x64xf32> -> vector<16x64xf32>
    %c0_5 = arith.constant 0 : index
    %c0_6 = arith.constant 0 : index
    %7 = vector.load %arg7[%c0_5, %c0_6] : memref<16x1xf32, #tpu.memory_space<vmem>>, vector<16x1xf32>
    %8 = vector.broadcast %7 : vector<16x1xf32> to vector<16x64xf32>
    %9 = arith.addf %6, %8 : vector<16x64xf32>
    %10 = arith.truncf %9 : vector<16x64xf32> to vector<16x64xbf16>
    %c0_7 = arith.constant 0 : index
    %c0_8 = arith.constant 0 : index
    %11 = vector.load %arg11[%c0_7, %c0_8] : memref<48x64xbf16, #tpu.memory_space<vmem>>, vector<16x64xbf16>
    %c16 = arith.constant 16 : index
    %c0_9 = arith.constant 0 : index
    %12 = vector.load %arg11[%c16, %c0_9] : memref<48x64xbf16, #tpu.memory_space<vmem>>, vector<32x64xbf16>
    %cst_10 = arith.constant dense<0.000000e+00> : vector<64x64xf32>
    %13 = tpu.matmul %10, %11, %cst_10 {dimension_numbers = #tpu.dot_dimension_numbers<[0], [0], [1], [1], [0, 1, 1, 1], [], []>} : vector<16x64xbf16>, vector<16x64xbf16>, vector<64x64xf32> -> vector<64x64xf32>
    %cst_11 = arith.constant dense<0xFF800000> : vector<64xf32>
    %14 = vector.multi_reduction <maximumf>, %13, %cst_11 [1] : vector<64x64xf32> to vector<64xf32>
    %15 = vector.shape_cast %14 : vector<64xf32> to vector<64x1xf32>
    %16 = vector.broadcast %15 : vector<64x1xf32> to vector<64x64xf32>
    %17 = arith.subf %13, %16 : vector<64x64xf32>
    %18 = math.exp %17 : vector<64x64xf32>
    %cst_12 = arith.constant dense<0.000000e+00> : vector<64xf32>
    %19 = vector.multi_reduction <add>, %18, %cst_12 [1] : vector<64x64xf32> to vector<64xf32>
    %20 = vector.shape_cast %19 : vector<64xf32> to vector<64x1xf32>
    %21 = tpu.reciprocal %20 {approx = true} : vector<64x1xf32> -> vector<64x1xf32>
    %22 = vector.broadcast %21 : vector<64x1xf32> to vector<64x64xf32>
    %23 = arith.mulf %18, %22 : vector<64x64xf32>
    %24 = arith.truncf %23 : vector<64x64xf32> to vector<64x64xbf16>
    %cst_13 = arith.constant dense<0.000000e+00> : vector<32x64xf32>
    %25 = tpu.matmul %12, %24, %cst_13 {dimension_numbers = #tpu.dot_dimension_numbers<[1], [1], [0], [0], [0, 0, 1, 0], [], []>} : vector<32x64xbf16>, vector<64x64xbf16>, vector<32x64xf32> -> vector<32x64xf32>
    %c0_14 = arith.constant 0 : index
    %26 = memref.load %arg8[%c0_14] : memref<1xf32, #tpu.memory_space<smem>>
    %27 = vector.broadcast %26 : f32 to vector<32x64xf32>
    %28 = arith.mulf %27, %25 : vector<32x64xf32>
    %29 = arith.addf %4, %28 : vector<32x64xf32>
    %c0_15 = arith.constant 0 : index
    %c0_16 = arith.constant 0 : index
    %c0_17 = arith.constant 0 : index
    %30 = vector.load %arg9[%c0_15, %c0_16, %c0_17] : memref<1x32x64xf32, #tpu.memory_space<vmem>>, vector<1x32x64xf32>
    %31 = vector.shape_cast %30 : vector<1x32x64xf32> to vector<32x64xf32>
    %32 = vector.shape_cast %29 : vector<32x64xf32> to vector<1x32x64xf32>
    tpu.vector_store %arg9[%c0_15, %c0_16, %c0_17], %32 {strides = array<i32>} : memref<1x32x64xf32, #tpu.memory_space<vmem>>, vector<1x32x64xf32>,
    %c0_18 = arith.constant 0 : index
    %c0_19 = arith.constant 0 : index
    %c0_20 = arith.constant 0 : index
    %33 = vector.load %arg10[%c0_18, %c0_19, %c0_20] : memref<1x64x64xf32, #tpu.memory_space<vmem>>, vector<1x64x64xf32>
    %34 = vector.shape_cast %33 : vector<1x64x64xf32> to vector<64x64xf32>
    %35 = vector.shape_cast %23 : vector<64x64xf32> to vector<1x64x64xf32>
    tpu.vector_store %arg10[%c0_18, %c0_19, %c0_20], %35 {strides = array<i32>} : memref<1x64x64xf32, #tpu.memory_space<vmem>>, vector<1x64x64xf32>,
    return
  }
  func.func @transform_0(%arg0: i32, %arg1: i32) -> (i32, i32, i32) {
    %c0_i32 = arith.constant 0 : i32
    %c0_i32_0 = arith.constant 0 : i32
    %c0_i32_1 = arith.constant 0 : i32
    return %arg0, %c0_i32, %c0_i32_0 : i32, i32, i32
  }
  func.func @transform_1(%arg0: i32, %arg1: i32) -> (i32, i32, i32) {
    %c0_i32 = arith.constant 0 : i32
    %c0_i32_0 = arith.constant 0 : i32
    return %arg0, %c0_i32, %arg1 : i32, i32, i32
  }
  func.func @transform_2(%arg0: i32, %arg1: i32) -> (i32, i32) {
    %c0_i32 = arith.constant 0 : i32
    %c0_i32_0 = arith.constant 0 : i32
    %c0_i32_1 = arith.constant 0 : i32
    return %c0_i32, %c0_i32_0 : i32, i32
  }
  func.func @transform_3(%arg0: i32, %arg1: i32) -> (i32, i32) {
    %c0_i32 = arith.constant 0 : i32
    %c0_i32_0 = arith.constant 0 : i32
    %c0_i32_1 = arith.constant 0 : i32
    return %c0_i32, %c0_i32_0 : i32, i32
  }
  func.func @transform_4(%arg0: i32, %arg1: i32) -> (i32, i32) {
    %c0_i32 = arith.constant 0 : i32
    %c0_i32_0 = arith.constant 0 : i32
    %c0_i32_1 = arith.constant 0 : i32
    return %c0_i32, %c0_i32_0 : i32, i32
  }
  func.func @transform_5(%arg0: i32, %arg1: i32) -> (i32, i32) {
    %c0_i32 = arith.constant 0 : i32
    %c0_i32_0 = arith.constant 0 : i32
    %c0_i32_1 = arith.constant 0 : i32
    return %c0_i32, %c0_i32_0 : i32, i32
  }
  func.func @transform_6(%arg0: i32, %arg1: i32) -> i32 {
    %c0_i32 = arith.constant 0 : i32
    %c0_i32_0 = arith.constant 0 : i32
    return %c0_i32 : i32
  }
  func.func @transform_7(%arg0: i32, %arg1: i32) -> (i32, i32, i32) {
    %c0_i32 = arith.constant 0 : i32
    %c0_i32_0 = arith.constant 0 : i32
    return %arg0, %c0_i32, %arg1 : i32, i32, i32
  }
  func.func @transform_8(%arg0: i32, %arg1: i32) -> (i32, i32, i32) {
    %c0_i32 = arith.constant 0 : i32
    %c0_i32_0 = arith.constant 0 : i32
    return %arg0, %arg1, %c0_i32 : i32, i32, i32
  }
}

</mosaic_0001>

<llo_original>
// kernel: self_attention_pallas.1
$region0: #{self_attention_pallas.1}
  #allocation0 [shape = 'u32[]', space=smem, size = 0x4, offset = 0x4, fixed_abs, tag = 'smem constant byte address 0x4 - core index']
  #allocation1 [shape = 'u32[144,128]{1,0:T(1,128)}', space=vmem, size = 0x12000, scoped, tag = 'internal scratch']
  #allocation2 [shape = 'bf16[48,64]{1,0:T(16,128)(2,1)}', space=vmem, size = 0x3000, scoped, tag = 'scratch operand']
  #allocation3 [shape = 'f32[1]{0:T(128)S(6)}', space=smem, size = 0x200, scoped, tag = 'scoped memory for self_attention_pallas.1']
  %s0 = inlined_call_operand.hbm [shape: f32[2,32,64], index: 0, kind: input, shape index: {}, may-alias: {0,1}]
  %s1 = inlined_call_operand.hbm [shape: f32[2,32,64], index: 1, kind: input, shape index: {}, may-alias: {0,1}]
  %s2 = inlined_call_operand.hbm [shape: f32[48,32], index: 2, kind: input, shape index: {}]
  %s3 = inlined_call_operand.hbm [shape: f32[48,1], index: 3, kind: input, shape index: {}]
  %s4 = inlined_call_operand.hbm [shape: f32[16,32], index: 4, kind: input, shape index: {}]
  %s5 = inlined_call_operand.hbm [shape: f32[16,1], index: 5, kind: input, shape index: {}]
  %s6 = inlined_call_operand.<no memory space> [shape: f32[1], index: 6, kind: input, shape index: {}]
  %s7 = inlined_call_operand.hbm [shape: f32[2,32,64], index: 7, kind: output, shape index: {0}]
  %s8 = inlined_call_operand.hbm [shape: f32[2,64,64], index: 8, kind: output, shape index: {1}]
  %9 = xla_tuple %s7, %s8
  %s10 = sld [smem:[#allocation0]]
  $region97: #{self_attention_pallas.1} parent=0
    _
  %s12 = ssub.s32 1, %s10
  %s13 = scalar_select 0, %s12, %s10
  %14 = sst [smem:[#allocation3]] %s6
  $region1: #{self_attention_pallas.1} parent=0
    #allocation4 [shape = 'u8[32768]{0}', space=vmem, size = 0x8000, scoped, tag = 'input window, operand 0']
    #allocation5 [shape = 's32[2]{0}', space=sflag, size = 0x8, scoped, tag = 'scoped memory for self_attention_pallas.1']
    #allocation6 [shape = 's32[2]{0}', space=sflag, size = 0x8, scoped, tag = 'scoped memory for self_attention_pallas.1']
    #allocation7 [shape = 'u8[32768]{0}', space=vmem, size = 0x8000, scoped, tag = 'input window, operand 1']
    #allocation8 [shape = 's32[2]{0}', space=sflag, size = 0x8, scoped, tag = 'scoped memory for self_attention_pallas.1']
    #allocation9 [shape = 'u8[24576]{0}', space=vmem, size = 0x6000, scoped, tag = 'input window, operand 2, single buffered']
    #allocation10 [shape = 'u8[24576]{0}', space=vmem, size = 0x6000, scoped, tag = 'input window, operand 3, single buffered']
    #allocation11 [shape = 's32[1]{0}', space=sflag, size = 0x4, scoped, tag = 'scoped memory for self_attention_pallas.1']
    #allocation12 [shape = 'u8[8192]{0}', space=vmem, size = 0x2000, scoped, tag = 'input window, operand 4, single buffered']
    #allocation13 [shape = 'u8[8192]{0}', space=vmem, size = 0x2000, scoped, tag = 'input window, operand 5, single buffered']
    #allocation14 [shape = 's32[1]{0}', space=sflag, size = 0x4, scoped, tag = 'scoped memory for self_attention_pallas.1']
    #allocation15 [shape = 'u8[32768]{0}', space=vmem, size = 0x8000, scoped, tag = 'output window, operand 0']
    #allocation16 [shape = 'u8[65536]{0}', space=vmem, size = 0x10000, scoped, tag = 'output window, operand 1']
    #allocation17 [shape = 's32[2]{0}', space=sflag, size = 0x8, scoped, tag = 'scoped memory for self_attention_pallas.1']
    %15 = vsyncpa [#allocation5], 0
    %s16 = scalar_lea.sflag [#allocation5], 1
    %17 = vsyncpa %s16, 0
    %18 = vsyncpa [#allocation8], 0
    %s19 = scalar_lea.sflag [#allocation8], 1
    %20 = vsyncpa %s19, 0
    %21 = vsyncpa [#allocation11], 0
    %22 = vsyncpa [#allocation14], 0
    %23 = vsyncpa [#allocation6], 0
    %s24 = scalar_lea.sflag [#allocation6], 1
    %25 = vsyncpa %s24, 0
    %26 = vsyncpa [#allocation17], 0
    %s27 = scalar_lea.sflag [#allocation17], 1
    %28 = vsyncpa %s27, 0
    loop: start=0, step=1, limit=4
    $region2: #{self_attention_pallas.1} parent=1 // loop_pre_header
      _
    $region3: #{self_attention_pallas.1} parent=1 // loop_header
      %s30 = sphi 0, %s34
      %p31 = scmp.ge.s32.totalorder %s30, 4
      %s37 = sphi 0, %s49
      %s38 = sphi 0, %s45
      %s39 = sphi 0, %s37
      %s40 = sphi 0, %s38
      %s41 = sphi 0, %s39
      %s42 = sphi 0, %s40
      %s52 = sphi 0, %s54
      %s55 = sphi 0, %s52
      %s56 = sphi 0, %s55
      %s72 = sphi 0, %s56
      %s80 = sphi 0, %s82
      %s83 = sphi 0, %s80
      %s84 = sphi 0, %s83
      %s100 = sphi 0, %s84
      %s104 = sphi 0, %s104
      %s106 = sphi 0, %s104
      %s107 = sphi 0, %s106
      %s121 = sphi 0, %s107
      %s125 = sphi 0, %s125
      %s127 = sphi 0, %s125
      %s128 = sphi 0, %s127
      %s142 = sphi 0, %s128
      %s146 = sphi 0, %s146
      %s148 = sphi 0, %s146
      %s149 = sphi 0, %s148
      %s163 = sphi 0, %s149
      %s167 = sphi 0, %s167
      %s169 = sphi 0, %s167
      %s170 = sphi 0, %s169
      %s184 = sphi 0, %s170
      %s188 = sphi 0, %s188
      %s190 = sphi 0, %s188
      %s191 = sphi 0, %s190
      %s205 = sphi 0, %s191
      %s213 = sphi 0, %s215
      %s216 = sphi 0, %s213
      %s217 = sphi 0, %s216
      %s233 = sphi 0, %s217
      %s241 = sphi 0, %s243
      %s244 = sphi 0, %s241
      %s245 = sphi 0, %s244
      %s261 = sphi 0, %s245
    $region4: #{self_attention_pallas.1} parent=1 // loop_header_branch
      %33 = sbr.rel (%p31) target = $region8
    $region5: #{self_attention_pallas.1} parent=1 // loop_body
      %s35 = ssub.s32 %s30, 1
      %s36 = ssub.s32 %s30, 2
      %s43 = sadd.s32 1, %s38
      %p44 = scmp.ge.s32.totalorder %s43, 1
      %s45 = scalar_select %p44, 0, %s43
      %s46 = sadd.s32 1, %s37
      %s47 = scalar_select %p44, %s46, %s37
      %p48 = scmp.ge.s32.totalorder %s47, 2
      %s49 = scalar_select %p48, 0, %s47
      %s50 = ssub.s32 %s37, %s49
      %p51 = scmp.eq.s32.totalorder %s50, 0
      %s53 = sadd.s32 %s52, 1
      %s54 = scalar_select %p51, %s52, %s53
      %p57 = pneg %p51
      %p58 = scmp.eq.s32.totalorder %s30, 1
      %p59 = por %p57, %p58
      %p60 = scmp.ne.s32.totalorder %s52, %s55
      %p61 = scmp.eq.s32.totalorder %s30, 0
      %p62 = por %p60, %p61
      %p63 = scmp.ne.s32.totalorder %s52, %s55
      %p64 = scmp.eq.s32.totalorder %s35, 1
      %p65 = por %p63, %p64
      %p66 = scmp.ne.s32.totalorder %s55, %s56
      %p67 = scmp.eq.s32.totalorder %s35, 0
      %p68 = por %p66, %p67
      %p69 = scmp.ne.s32.totalorder %s55, %s56
      %p70 = scmp.eq.s32.totalorder %s36, 1
      %p71 = por %p69, %p70
      %p73 = scmp.ne.s32.totalorder %s56, %s72
      %p74 = scmp.eq.s32.totalorder %s36, 0
      %p75 = por %p73, %p74
      %s76 = ssub.s32 %s37, %s49
      %s77 = ssub.s32 %s38, %s45
      %s78 = sor.u32 %s76, %s77
      %p79 = scmp.eq.s32.totalorder %s78, 0
      %s81 = sadd.s32 %s80, 1
      %s82 = scalar_select %p79, %s80, %s81
      %p85 = pneg %p79
      %p86 = scmp.eq.s32.totalorder %s30, 1
      %p87 = por %p85, %p86
      %p88 = scmp.ne.s32.totalorder %s80, %s83
      %p89 = scmp.eq.s32.totalorder %s30, 0
      %p90 = por %p88, %p89
      %p91 = scmp.ne.s32.totalorder %s80, %s83
      %p92 = scmp.eq.s32.totalorder %s35, 1
      %p93 = por %p91, %p92
      %p94 = scmp.ne.s32.totalorder %s83, %s84
      %p95 = scmp.eq.s32.totalorder %s35, 0
      %p96 = por %p94, %p95
      %p97 = scmp.ne.s32.totalorder %s83, %s84
      %p98 = scmp.eq.s32.totalorder %s36, 1
      %p99 = por %p97, %p98
      %p101 = scmp.ne.s32.totalorder %s84, %s100
      %p102 = scmp.eq.s32.totalorder %s36, 0
      %p103 = por %p101, %p102
      %s105 = sadd.s32 %s104, 1
      %p108 = scmp.eq.s32.totalorder %s30, 1
      %p109 = scmp.ne.s32.totalorder %s104, %s106
      %p110 = scmp.eq.s32.totalorder %s30, 0
      %p111 = por %p109, %p110
      %p112 = scmp.ne.s32.totalorder %s104, %s106
      %p113 = scmp.eq.s32.totalorder %s35, 1
      %p114 = por %p112, %p113
      %p115 = scmp.ne.s32.totalorder %s106, %s107
      %p116 = scmp.eq.s32.totalorder %s35, 0
      %p117 = por %p115, %p116
      %p118 = scmp.ne.s32.totalorder %s106, %s107
      %p119 = scmp.eq.s32.totalorder %s36, 1
      %p120 = por %p118, %p119
      %p122 = scmp.ne.s32.totalorder %s107, %s121
      %p123 = scmp.eq.s32.totalorder %s36, 0
      %p124 = por %p122, %p123
      %s126 = sadd.s32 %s125, 1
      %p129 = scmp.eq.s32.totalorder %s30, 1
      %p130 = scmp.ne.s32.totalorder %s125, %s127
      %p131 = scmp.eq.s32.totalorder %s30, 0
      %p132 = por %p130, %p131
      %p133 = scmp.ne.s32.totalorder %s125, %s127
      %p134 = scmp.eq.s32.totalorder %s35, 1
      %p135 = por %p133, %p134
      %p136 = scmp.ne.s32.totalorder %s127, %s128
      %p137 = scmp.eq.s32.totalorder %s35, 0
      %p138 = por %p136, %p137
      %p139 = scmp.ne.s32.totalorder %s127, %s128
      %p140 = scmp.eq.s32.totalorder %s36, 1
      %p141 = por %p139, %p140
      %p143 = scmp.ne.s32.totalorder %s128, %s142
      %p144 = scmp.eq.s32.totalorder %s36, 0
      %p145 = por %p143, %p144
      %s147 = sadd.s32 %s146, 1
      %p150 = scmp.eq.s32.totalorder %s30, 1
      %p151 = scmp.ne.s32.totalorder %s146, %s148
      %p152 = scmp.eq.s32.totalorder %s30, 0
      %p153 = por %p151, %p152
      %p154 = scmp.ne.s32.totalorder %s146, %s148
      %p155 = scmp.eq.s32.totalorder %s35, 1
      %p156 = por %p154, %p155
      %p157 = scmp.ne.s32.totalorder %s148, %s149
      %p158 = scmp.eq.s32.totalorder %s35, 0
      %p159 = por %p157, %p158
      %p160 = scmp.ne.s32.totalorder %s148, %s149
      %p161 = scmp.eq.s32.totalorder %s36, 1
      %p162 = por %p160, %p161
      %p164 = scmp.ne.s32.totalorder %s149, %s163
      %p165 = scmp.eq.s32.totalorder %s36, 0
      %p166 = por %p164, %p165
      %s168 = sadd.s32 %s167, 1
      %p171 = scmp.eq.s32.totalorder %s30, 1
      %p172 = scmp.ne.s32.totalorder %s167, %s169
      %p173 = scmp.eq.s32.totalorder %s30, 0
      %p174 = por %p172, %p173
      %p175 = scmp.ne.s32.totalorder %s167, %s169
      %p176 = scmp.eq.s32.totalorder %s35, 1
      %p177 = por %p175, %p176
      %p178 = scmp.ne.s32.totalorder %s169, %s170
      %p179 = scmp.eq.s32.totalorder %s35, 0
      %p180 = por %p178, %p179
      %p181 = scmp.ne.s32.totalorder %s169, %s170
      %p182 = scmp.eq.s32.totalorder %s36, 1
      %p183 = por %p181, %p182
      %p185 = scmp.ne.s32.totalorder %s170, %s184
      %p186 = scmp.eq.s32.totalorder %s36, 0
      %p187 = por %p185, %p186
      %s189 = sadd.s32 %s188, 1
      %p192 = scmp.eq.s32.totalorder %s30, 1
      %p193 = scmp.ne.s32.totalorder %s188, %s190
      %p194 = scmp.eq.s32.totalorder %s30, 0
      %p195 = por %p193, %p194
      %p196 = scmp.ne.s32.totalorder %s188, %s190
      %p197 = scmp.eq.s32.totalorder %s35, 1
      %p198 = por %p196, %p197
      %p199 = scmp.ne.s32.totalorder %s190, %s191
      %p200 = scmp.eq.s32.totalorder %s35, 0
      %p201 = por %p199, %p200
      %p202 = scmp.ne.s32.totalorder %s190, %s191
      %p203 = scmp.eq.s32.totalorder %s36, 1
      %p204 = por %p202, %p203
      %p206 = scmp.ne.s32.totalorder %s191, %s205
      %p207 = scmp.eq.s32.totalorder %s36, 0
      %p208 = por %p206, %p207
      %s209 = ssub.s32 %s37, %s49
      %s210 = ssub.s32 %s38, %s45
      %s211 = sor.u32 %s209, %s210
      %p212 = scmp.eq.s32.totalorder %s211, 0
      %s214 = sadd.s32 %s213, 1
      %s215 = scalar_select %p212, %s213, %s214
      %p218 = pneg %p212
      %p219 = scmp.eq.s32.totalorder %s30, 1
      %p220 = por %p218, %p219
      %p221 = scmp.ne.s32.totalorder %s213, %s216
      %p222 = scmp.eq.s32.totalorder %s30, 0
      %p223 = por %p221, %p222
      %p224 = scmp.ne.s32.totalorder %s213, %s216
      %p225 = scmp.eq.s32.totalorder %s35, 1
      %p226 = por %p224, %p225
      %p227 = scmp.ne.s32.totalorder %s216, %s217
      %p228 = scmp.eq.s32.totalorder %s35, 0
      %p229 = por %p227, %p228
      %p230 = scmp.ne.s32.totalorder %s216, %s217
      %p231 = scmp.eq.s32.totalorder %s36, 1
      %p232 = por %p230, %p231
      %p234 = scmp.ne.s32.totalorder %s217, %s233
      %p235 = scmp.eq.s32.totalorder %s36, 0
      %p236 = por %p234, %p235
      %s237 = ssub.s32 %s37, %s49
      %s238 = ssub.s32 %s38, %s45
      %s239 = sor.u32 %s237, %s238
      %p240 = scmp.eq.s32.totalorder %s239, 0
      %s242 = sadd.s32 %s241, 1
      %s243 = scalar_select %p240, %s241, %s242
      %p246 = pneg %p240
      %p247 = scmp.eq.s32.totalorder %s30, 1
      %p248 = por %p246, %p247
      %p249 = scmp.ne.s32.totalorder %s241, %s244
      %p250 = scmp.eq.s32.totalorder %s30, 0
      %p251 = por %p249, %p250
      %p252 = scmp.ne.s32.totalorder %s241, %s244
      %p253 = scmp.eq.s32.totalorder %s35, 1
      %p254 = por %p252, %p253
      %p255 = scmp.ne.s32.totalorder %s244, %s245
      %p256 = scmp.eq.s32.totalorder %s35, 0
      %p257 = por %p255, %p256
      %p258 = scmp.ne.s32.totalorder %s244, %s245
      %p259 = scmp.eq.s32.totalorder %s36, 1
      %p260 = por %p258, %p259
      %p262 = scmp.ne.s32.totalorder %s245, %s261
      %p263 = scmp.eq.s32.totalorder %s36, 0
      %p264 = por %p262, %p263
      %p265 = scmp.le.s32.totalorder 1, %s30
      %p266 = scmp.lt.s32.totalorder %s30, 3
      %p267 = pnand %p265, %p266
      %p268 = pneg %p267
      // Predicated region
      $region9: #{self_attention_pallas.1} parent=5 // pred_check
        _
      $region10: #{self_attention_pallas.1} parent=5 // pred_check_branch
        %270 = sbr.rel (%p267) target = $region12
      $region11: #{self_attention_pallas.1} parent=5 // pred_region
        %s271 = ssub.s32 %s30, 1
        // Predicated region
        $region13: #{self_attention_pallas.1} parent=11 // pred_check
          %p272 = pneg %p117
        $region14: #{self_attention_pallas.1} parent=11 // pred_check_branch
          %274 = sbr.rel (%p272) target = $region16
        $region15: #{self_attention_pallas.1} parent=11 // pred_region
          %s276 = ssub.s32 768, 768
          %277 = vsyncadd [#allocation8], %s276
          %s278 = sshll.u32 [#allocation9], 4
          %s279 = int_to_ptr.vmem [resolvable:$true] %s278
          %284 = dma.hbm_to_vmem [thread:$0]  %s2, 768, %s279, [#allocation8], 128, 128, 8
        $region16: #{self_attention_pallas.1} parent=11 // pred_fallthru
          _
        // Predicated region
        $region17: #{self_attention_pallas.1} parent=11 // pred_check
          %p285 = pneg %p138
        $region18: #{self_attention_pallas.1} parent=11 // pred_check_branch
          %287 = sbr.rel (%p285) target = $region20
        $region19: #{self_attention_pallas.1} parent=11 // pred_region
          %s289 = ssub.s32 768, 768
          %290 = vsyncadd [#allocation11], %s289
          %s291 = sshll.u32 [#allocation10], 4
          %s292 = int_to_ptr.vmem [resolvable:$true] %s291
          %297 = dma.hbm_to_vmem [thread:$0]  %s3, 768, %s292, [#allocation11], 128, 128, 8
        $region20: #{self_attention_pallas.1} parent=11 // pred_fallthru
          _
        // Predicated region
        $region21: #{self_attention_pallas.1} parent=11 // pred_check
          %p298 = pneg %p159
        $region22: #{self_attention_pallas.1} parent=11 // pred_check_branch
          %300 = sbr.rel (%p298) target = $region24
        $region23: #{self_attention_pallas.1} parent=11 // pred_region
          %s302 = ssub.s32 256, 256
          %303 = vsyncadd [#allocation11], %s302
          %s304 = sshll.u32 [#allocation12], 4
          %s305 = int_to_ptr.vmem [resolvable:$true] %s304
          %310 = dma.hbm_to_vmem [thread:$0]  %s4, 256, %s305, [#allocation11], 128, 128, 8
        $region24: #{self_attention_pallas.1} parent=11 // pred_fallthru
          _
        // Predicated region
        $region25: #{self_attention_pallas.1} parent=11 // pred_check
          %p311 = pneg %p180
        $region26: #{self_attention_pallas.1} parent=11 // pred_check_branch
          %313 = sbr.rel (%p311) target = $region28
        $region27: #{self_attention_pallas.1} parent=11 // pred_region
          %s315 = ssub.s32 256, 256
          %316 = vsyncadd [#allocation14], %s315
          %s317 = sshll.u32 [#allocation13], 4
          %s318 = int_to_ptr.vmem [resolvable:$true] %s317
          %323 = dma.hbm_to_vmem [thread:$0]  %s5, 256, %s318, [#allocation14], 128, 128, 8
        $region28: #{self_attention_pallas.1} parent=11 // pred_fallthru
          _
        // Predicated region
        $region29: #{self_attention_pallas.1} parent=11 // pred_check
          %p324 = pneg %p201
        $region30: #{self_attention_pallas.1} parent=11 // pred_check_branch
          %326 = sbr.rel (%p324) target = $region32
        $region31: #{self_attention_pallas.1} parent=11 // pred_region
          _
        $region32: #{self_attention_pallas.1} parent=11 // pred_fallthru
          _
      $region12: #{self_attention_pallas.1} parent=5 // pred_fallthru
        _
      %p327 = scmp.lt.s32.totalorder %s30, 2
      // Predicated region
      $region33: #{self_attention_pallas.1} parent=5 // pred_check
        %p328 = pneg %p327
      $region34: #{self_attention_pallas.1} parent=5 // pred_check_branch
        %330 = sbr.rel (%p328) target = $region36
      $region35: #{self_attention_pallas.1} parent=5 // pred_region
        // Predicated region
        $region37: #{self_attention_pallas.1} parent=35 // pred_check
          %p331 = pneg %p62
        $region38: #{self_attention_pallas.1} parent=35 // pred_check_branch
          %333 = sbr.rel (%p331) target = $region40
        $region39: #{self_attention_pallas.1} parent=35 // pred_region
          %s334 = sand.u32 %s52, 1
          %s335 = scalar_lea.sflag [#allocation5], %s334
          %s336 = sand.u32 %s52, 1
          %s337 = smul.addr %s336, 32
          %s338 = scalar_lea.vmem [#allocation4], %s337
          %s340 = ssub.s32 512, 512
          %341 = vsyncadd %s335, %s340
          %s342 = smul.addr %s37, 4
          %s343 = smul.addr %s342, 128
          %s344 = scalar_lea.hbm %s0, %s343
          %s345 = sshll.u32 %s338, 4
          %s346 = int_to_ptr.vmem [resolvable:$true] %s345
          %351 = dma.hbm_to_vmem [thread:$0]  %s344, 512, %s346, %s335, 128, 128, 8
        $region40: #{self_attention_pallas.1} parent=35 // pred_fallthru
          _
        // Predicated region
        $region41: #{self_attention_pallas.1} parent=35 // pred_check
          %p352 = pneg %p90
        $region42: #{self_attention_pallas.1} parent=35 // pred_check_branch
          %354 = sbr.rel (%p352) target = $region44
        $region43: #{self_attention_pallas.1} parent=35 // pred_region
          %s355 = sand.u32 %s30, 1
          %s356 = scalar_lea.sflag [#allocation8], %s355
          %s357 = sand.u32 %s80, 1
          %s358 = smul.addr %s357, 32
          %s359 = scalar_lea.vmem [#allocation7], %s358
          %s361 = ssub.s32 512, 512
          %362 = vsyncadd %s356, %s361
          %s363 = smul.addr %s37, 4
          %s364 = sadd.s32 %s38, %s363
          %s365 = smul.addr %s364, 128
          %s366 = scalar_lea.hbm %s1, %s365
          %s367 = sshll.u32 %s359, 4
          %s368 = int_to_ptr.vmem [resolvable:$true] %s367
          %373 = dma.hbm_to_vmem [thread:$0]  %s366, 512, %s368, %s356, 128, 128, 8
        $region44: #{self_attention_pallas.1} parent=35 // pred_fallthru
          _
      $region36: #{self_attention_pallas.1} parent=5 // pred_fallthru
        _
      %p374 = scmp.le.s32.totalorder 1, %s30
      %p375 = scmp.lt.s32.totalorder %s30, 3
      %p376 = pnand %p374, %p375
      %p377 = pneg %p376
      // Predicated region
      $region45: #{self_attention_pallas.1} parent=5 // pred_check
        _
      $region46: #{self_attention_pallas.1} parent=5 // pred_check_branch
        %379 = sbr.rel (%p376) target = $region48
      $region47: #{self_attention_pallas.1} parent=5 // pred_region
        %s380 = ssub.s32 %s30, 1
        %s381 = sand.u32 %s55, 1
        %s382 = scalar_lea.sflag [#allocation5], %s381
        %s383 = sand.u32 %s55, 1
        %s384 = smul.addr %s383, 32
        %s385 = scalar_lea.vmem [#allocation4], %s384
        // Predicated region
        $region49: #{self_attention_pallas.1} parent=47 // pred_check
          %p386 = pneg %p68
        $region50: #{self_attention_pallas.1} parent=47 // pred_check_branch
          %388 = sbr.rel (%p386) target = $region52
        $region51: #{self_attention_pallas.1} parent=47 // pred_region
          %389 = dma.done %s382, 512
        $region52: #{self_attention_pallas.1} parent=47 // pred_fallthru
          _
        %s390 = sand.u32 %s35, 1
        %s391 = scalar_lea.sflag [#allocation8], %s390
        %s392 = sand.u32 %s83, 1
        %s393 = smul.addr %s392, 32
        %s394 = scalar_lea.vmem [#allocation7], %s393
        // Predicated region
        $region53: #{self_attention_pallas.1} parent=47 // pred_check
          %p395 = pneg %p96
        $region54: #{self_attention_pallas.1} parent=47 // pred_check_branch
          %397 = sbr.rel (%p395) target = $region56
        $region55: #{self_attention_pallas.1} parent=47 // pred_region
          %398 = dma.done %s391, 512
        $region56: #{self_attention_pallas.1} parent=47 // pred_fallthru
          _
        // Predicated region
        $region57: #{self_attention_pallas.1} parent=47 // pred_check
          %p399 = pneg %p117
        $region58: #{self_attention_pallas.1} parent=47 // pred_check_branch
          %401 = sbr.rel (%p399) target = $region60
        $region59: #{self_attention_pallas.1} parent=47 // pred_region
          %402 = dma.done [#allocation8], 768
        $region60: #{self_attention_pallas.1} parent=47 // pred_fallthru
          _
        // Predicated region
        $region61: #{self_attention_pallas.1} parent=47 // pred_check
          %p403 = pneg %p138
        $region62: #{self_attention_pallas.1} parent=47 // pred_check_branch
          %405 = sbr.rel (%p403) target = $region64
        $region63: #{self_attention_pallas.1} parent=47 // pred_region
          %406 = dma.done [#allocation11], 768
        $region64: #{self_attention_pallas.1} parent=47 // pred_fallthru
          _
        // Predicated region
        $region65: #{self_attention_pallas.1} parent=47 // pred_check
          %p407 = pneg %p159
        $region66: #{self_attention_pallas.1} parent=47 // pred_check_branch
          %409 = sbr.rel (%p407) target = $region68
        $region67: #{self_attention_pallas.1} parent=47 // pred_region
          %410 = dma.done [#allocation11], 256
        $region68: #{self_attention_pallas.1} parent=47 // pred_fallthru
          _
        // Predicated region
        $region69: #{self_attention_pallas.1} parent=47 // pred_check
          %p411 = pneg %p180
        $region70: #{self_attention_pallas.1} parent=47 // pred_check_branch
          %413 = sbr.rel (%p411) target = $region72
        $region71: #{self_attention_pallas.1} parent=47 // pred_region
          %414 = dma.done [#allocation14], 256
        $region72: #{self_attention_pallas.1} parent=47 // pred_fallthru
          _
        %s415 = sand.u32 %s55, 1
        %s416 = scalar_lea.sflag [#allocation5], %s415
        %s417 = sand.u32 %s55, 1
        %s418 = smul.addr %s417, 32
        %s419 = scalar_lea.vmem [#allocation4], %s418
        %p420 = pneg %p68
        %p421 = pneg %p65
        %s422 = sand.u32 %s35, 1
        %s423 = scalar_lea.sflag [#allocation8], %s422
        %s424 = sand.u32 %s83, 1
        %s425 = smul.addr %s424, 32
        %s426 = scalar_lea.vmem [#allocation7], %s425
        %p427 = pneg %p96
        %p428 = pneg %p93
        %p429 = pneg %p117
        %p430 = pneg %p114
        %p431 = pneg %p138
        %p432 = pneg %p135
        %p433 = pneg %p159
        %p434 = pneg %p156
        %p435 = pneg %p180
        %p436 = pneg %p177
        %p437 = pneg %p201
        %p438 = pneg %p198
        %p439 = pneg %p229
        %p440 = pneg %p226
        %s441 = sand.u32 %s216, 1
        %s442 = scalar_lea.sflag [#allocation6], %s441
        %s443 = sand.u32 %s216, 1
        %s444 = smul.addr %s443, 32
        %s445 = scalar_lea.vmem [#allocation15], %s444
        %p446 = pneg %p257
        %p447 = pneg %p254
        %s448 = sand.u32 %s244, 1
        %s449 = scalar_lea.sflag [#allocation17], %s448
        %s450 = sand.u32 %s244, 1
        %s451 = smul.addr %s450, 64
        %s452 = scalar_lea.vmem [#allocation16], %s451
        %s453 = smul.u32 8, %s40
        %p455 = scmp.eq.s32.totalorder %s40, 0
        // Predicated region
        $region73: #{self_attention_pallas.1} parent=47 // pred_check
          %p456 = pneg %p455
        $region74: #{self_attention_pallas.1} parent=47 // pred_check_branch
          %458 = sbr.rel (%p456) target = $region76
        $region75: #{self_attention_pallas.1} parent=47 // pred_region
          %v459 = vld [vmem:[%s385] sm:$0xff]
          %v460 = vld [vmem:[%s385 + $0x8] sm:$0xff]
          %v461 = vld [vmem:[%s385 + $0x10] sm:$0xff]
          %v462 = vld [vmem:[%s385 + $0x18] sm:$0xff]
          %v463 = vld [vmem:[#allocation9] sm:$0xff]
          %v464 = vld [vmem:[#allocation9 + $0x8] sm:$0xff]
          %v465 = vld [vmem:[#allocation9 + $0x10] sm:$0xff]
          %v466 = vld [vmem:[#allocation9 + $0x18] sm:$0xff]
          %v467 = vld [vmem:[#allocation9 + $0x20] sm:$0xff]
          %v468 = vld [vmem:[#allocation9 + $0x28] sm:$0xff]
          %v469 = vld [vmem:[#allocation10] sm:$0xff]
          %v470 = vld [vmem:[#allocation10 + $0x8] sm:$0xff]
          %v471 = vld [vmem:[#allocation10 + $0x10] sm:$0xff]
          %v472 = vld [vmem:[#allocation10 + $0x18] sm:$0xff]
          %v473 = vld [vmem:[#allocation10 + $0x20] sm:$0xff]
          %v474 = vld [vmem:[#allocation10 + $0x28] sm:$0xff]
          %476 = vset.pattern.permute.xlu0 0
          %477 = vperm.xlu0 %476, %v469
          %v478 = vpop.permute.xlu0 %477
          %481 = vset.pattern.permute.xlu0 0
          %482 = vperm.xlu0 %481, %v470
          %v483 = vpop.permute.xlu0 %482
          %486 = vset.pattern.permute.xlu0 0
          %487 = vperm.xlu0 %486, %v471
          %v488 = vpop.permute.xlu0 %487
          %491 = vset.pattern.permute.xlu0 0
          %492 = vperm.xlu0 %491, %v472
          %v493 = vpop.permute.xlu0 %492
          %496 = vset.pattern.permute.xlu0 0
          %497 = vperm.xlu0 %496, %v473
          %v498 = vpop.permute.xlu0 %497
          %501 = vset.pattern.permute.xlu0 0
          %502 = vperm.xlu0 %501, %v474
          %v503 = vpop.permute.xlu0 %502
          %vm505 = vcmask 261120
          %v507 = vsel %vm505, %v463, 0
          %v510 = vsel %vm505, %v464, 0
          %v513 = vsel %vm505, %v465, 0
          %v516 = vsel %vm505, %v466, 0
          %v519 = vsel %vm505, %v467, 0
          %v522 = vsel %vm505, %v468, 0
          %524 = vmatprep.subr.mxu0 0.0
          %525 = vmatpush1.msra.mxu0 %v459
          %526 = vmatprep.subr.mxu0 0.0
          %527 = vmatpush1.msra.mxu0 %v460
          %528 = vmatprep.subr.mxu0 0.0
          %529 = vmatpush1.msra.mxu0 %v461
          %530 = vmatprep.subr.mxu0 0.0
          %531 = vmatpush1.msra.mxu0 %v462
          %532 = vmatprep.subr.mxu0 0.0
          %533 = vmatpush1.msra.mxu0 0.0
          %534 = vmatprep.subr.mxu0 0.0
          %535 = vmatpush1.msra.mxu0 0.0
          %536 = vmatprep.subr.mxu0 0.0
          %537 = vmatpush1.msra.mxu0 0.0
          %538 = vmatprep.subr.mxu0 0.0
          %539 = vmatpush1.msra.mxu0 0.0
          %540 = vmatprep.subr.mxu0 0.0
          %541 = vmatpush1.msra.mxu0 0.0
          %542 = vmatprep.subr.mxu0 0.0
          %543 = vmatpush1.msra.mxu0 0.0
          %544 = vmatprep.subr.mxu0 0.0
          %545 = vmatpush1.msra.mxu0 0.0
          %546 = vmatprep.subr.mxu0 0.0
          %547 = vmatpush1.msra.mxu0 0.0
          %548 = vmatprep.subr.mxu0 0.0
          %549 = vmatpush1.msra.mxu0 0.0
          %550 = vmatprep.subr.mxu0 0.0
          %551 = vmatpush1.msra.mxu0 0.0
          %552 = vmatprep.subr.mxu0 0.0
          %553 = vmatpush1.msra.mxu0 0.0
          %554 = vmatprep.subr.mxu0 0.0
          %555 = vmatpush1.msra.mxu0 0.0
          %556 = vmatprep.subr.mxu0 0.0
          %557 = vmatpush1.msra.mxu0 0.0
          %558 = vmatprep.subr.mxu0 0.0
          %559 = vmatpush1.msra.mxu0 0.0
          %560 = vmatprep.subr.mxu0 0.0
          %561 = vmatpush1.msra.mxu0 0.0
          %562 = vmatprep.subr.mxu0 0.0
          %563 = vmatpush1.msra.mxu0 0.0
          %564 = vmatprep.subr.mxu0 0.0
          %565 = vmatpush1.msra.mxu0 0.0
          %566 = vmatprep.subr.mxu0 0.0
          %567 = vmatpush1.msra.mxu0 0.0
          %568 = vmatprep.subr.mxu0 0.0
          %569 = vmatpush1.msra.mxu0 0.0
          %570 = vmatprep.subr.mxu0 0.0
          %571 = vmatpush1.msra.mxu0 0.0
          %572 = vmatprep.subr.mxu0 0.0
          %573 = vmatpush1.msra.mxu0 0.0
          %574 = vmatprep.subr.mxu0 0.0
          %575 = vmatpush1.msra.mxu0 0.0
          %576 = vmatprep.subr.mxu0 0.0
          %577 = vmatpush1.msra.mxu0 0.0
          %578 = vmatprep.subr.mxu0 0.0
          %579 = vmatpush1.msra.mxu0 0.0
          %580 = vmatprep.subr.mxu0 0.0
          %581 = vmatpush1.msra.mxu0 0.0
          %582 = vmatprep.subr.mxu0 0.0
          %583 = vmatpush1.msra.mxu0 0.0
          %584 = vmatprep.subr.mxu0 0.0
          %585 = vmatpush1.msra.mxu0 0.0
          %586 = vmatprep.subr.mxu0 0.0
          %587 = vmatpush1.msra.mxu0 0.0
          %588 = vmatprep.mubr.f32.mxu0 0.0
          %589 = vmatmul.mubr.f32.gmra.mrb[0].mxu0 %v507
          %v590 = vpop.f32.mrb[0].mxu0
          %v591 = vadd.f32 %v478, %v590
          %v592 = vpop.f32.mrb[0].mxu0
          %593 = vmatprep.mubr.f32.mxu0 0.0
          %594 = vmatmul.mubr.f32.gmra.mrb[0].mxu0 %v510
          %v595 = vpop.f32.mrb[0].mxu0
          %v596 = vadd.f32 %v483, %v595
          %v597 = vpop.f32.mrb[0].mxu0
          %598 = vmatprep.mubr.f32.mxu0 0.0
          %599 = vmatmul.mubr.f32.gmra.mrb[0].mxu0 %v513
          %v600 = vpop.f32.mrb[0].mxu0
          %v601 = vadd.f32 %v488, %v600
          %v602 = vpop.f32.mrb[0].mxu0
          %603 = vmatprep.mubr.f32.mxu0 0.0
          %604 = vmatmul.mubr.f32.gmra.mrb[0].mxu0 %v516
          %v605 = vpop.f32.mrb[0].mxu0
          %v606 = vadd.f32 %v493, %v605
          %v607 = vpop.f32.mrb[0].mxu0
          %608 = vmatprep.mubr.f32.mxu0 0.0
          %609 = vmatmul.mubr.f32.gmra.mrb[0].mxu0 %v519
          %v610 = vpop.f32.mrb[0].mxu0
          %v611 = vadd.f32 %v498, %v610
          %v612 = vpop.f32.mrb[0].mxu0
          %613 = vmatprep.mubr.f32.mxu0 0.0
          %614 = vmatmul.mubr.f32.gmra.mrb[0].mxu0 %v522
          %v615 = vpop.f32.mrb[0].mxu0
          %v616 = vadd.f32 %v503, %v615
          %v617 = vpop.f32.mrb[0].mxu0
          %618 = vdwg.mxu0
          %v619 = vpack.c.bf16 %v596, %v591
          %v620 = vpack.c.bf16 %v606, %v601
          %v621 = vpack.c.bf16 %v616, %v611
          %vm622 = vcmask 523264
          %623 = vst.msk [vmem:[#allocation2] sm:$0xff] %vm622, %v619
          %624 = vst.msk [vmem:[#allocation2 + $0x8] sm:$0xff] %vm622, %v620
          %625 = vst.msk [vmem:[#allocation2 + $0x10] sm:$0xff] %vm622, %v621
        $region76: #{self_attention_pallas.1} parent=47 // pred_fallthru
          _
        %v626 = vld [vmem:[%s394] sm:$0xff]
        %v627 = vld [vmem:[%s394 + $0x8] sm:$0xff]
        %v628 = vld [vmem:[%s394 + $0x10] sm:$0xff]
        %v629 = vld [vmem:[%s394 + $0x18] sm:$0xff]
        %v630 = vld [vmem:[#allocation12] sm:$0xff]
        %v631 = vld [vmem:[#allocation12 + $0x8] sm:$0xff]
        %v632 = vld [vmem:[#allocation13] sm:$0xff]
        %v633 = vld [vmem:[#allocation13 + $0x8] sm:$0xff]
        %635 = vset.pattern.permute.xlu0 0
        %636 = vperm.xlu0 %635, %v632
        %v637 = vpop.permute.xlu0 %636
        %640 = vset.pattern.permute.xlu0 0
        %641 = vperm.xlu0 %640, %v633
        %v642 = vpop.permute.xlu0 %641
        %vm644 = vcmask 261120
        %v646 = vsel %vm644, %v630, 0
        %v649 = vsel %vm644, %v631, 0
        %651 = vmatprep.subr.mxu0 0.0
        %652 = vmatpush1.msra.mxu0 %v626
        %653 = vmatprep.subr.mxu0 0.0
        %654 = vmatpush1.msra.mxu0 %v627
        %655 = vmatprep.subr.mxu0 0.0
        %656 = vmatpush1.msra.mxu0 %v628
        %657 = vmatprep.subr.mxu0 0.0
        %658 = vmatpush1.msra.mxu0 %v629
        %659 = vmatprep.subr.mxu0 0.0
        %660 = vmatpush1.msra.mxu0 0.0
        %661 = vmatprep.subr.mxu0 0.0
        %662 = vmatpush1.msra.mxu0 0.0
        %663 = vmatprep.subr.mxu0 0.0
        %664 = vmatpush1.msra.mxu0 0.0
        %665 = vmatprep.subr.mxu0 0.0
        %666 = vmatpush1.msra.mxu0 0.0
        %667 = vmatprep.subr.mxu0 0.0
        %668 = vmatpush1.msra.mxu0 0.0
        %669 = vmatprep.subr.mxu0 0.0
        %670 = vmatpush1.msra.mxu0 0.0
        %671 = vmatprep.subr.mxu0 0.0
        %672 = vmatpush1.msra.mxu0 0.0
        %673 = vmatprep.subr.mxu0 0.0
        %674 = vmatpush1.msra.mxu0 0.0
        %675 = vmatprep.subr.mxu0 0.0
        %676 = vmatpush1.msra.mxu0 0.0
        %677 = vmatprep.subr.mxu0 0.0
        %678 = vmatpush1.msra.mxu0 0.0
        %679 = vmatprep.subr.mxu0 0.0
        %680 = vmatpush1.msra.mxu0 0.0
        %681 = vmatprep.subr.mxu0 0.0
        %682 = vmatpush1.msra.mxu0 0.0
        %683 = vmatprep.subr.mxu0 0.0
        %684 = vmatpush1.msra.mxu0 0.0
        %685 = vmatprep.subr.mxu0 0.0
        %686 = vmatpush1.msra.mxu0 0.0
        %687 = vmatprep.subr.mxu0 0.0
        %688 = vmatpush1.msra.mxu0 0.0
        %689 = vmatprep.subr.mxu0 0.0
        %690 = vmatpush1.msra.mxu0 0.0
        %691 = vmatprep.subr.mxu0 0.0
        %692 = vmatpush1.msra.mxu0 0.0
        %693 = vmatprep.subr.mxu0 0.0
        %694 = vmatpush1.msra.mxu0 0.0
        %695 = vmatprep.subr.mxu0 0.0
        %696 = vmatpush1.msra.mxu0 0.0
        %697 = vmatprep.subr.mxu0 0.0
        %698 = vmatpush1.msra.mxu0 0.0
        %699 = vmatprep.subr.mxu0 0.0
        %700 = vmatpush1.msra.mxu0 0.0
        %701 = vmatprep.subr.mxu0 0.0
        %702 = vmatpush1.msra.mxu0 0.0
        %703 = vmatprep.subr.mxu0 0.0
        %704 = vmatpush1.msra.mxu0 0.0
        %705 = vmatprep.subr.mxu0 0.0
        %706 = vmatpush1.msra.mxu0 0.0
        %707 = vmatprep.subr.mxu0 0.0
        %708 = vmatpush1.msra.mxu0 0.0
        %709 = vmatprep.subr.mxu0 0.0
        %710 = vmatpush1.msra.mxu0 0.0
        %711 = vmatprep.subr.mxu0 0.0
        %712 = vmatpush1.msra.mxu0 0.0
        %713 = vmatprep.subr.mxu0 0.0
        %714 = vmatpush1.msra.mxu0 0.0
        %715 = vmatprep.mubr.f32.mxu0 0.0
        %716 = vmatmul.mubr.f32.gmra.mrb[0].mxu0 %v646
        %v717 = vpop.f32.mrb[0].mxu0
        %v718 = vadd.f32 %v637, %v717
        %v719 = vpop.f32.mrb[0].mxu0
        %720 = vmatprep.mubr.f32.mxu0 0.0
        %721 = vmatmul.mubr.f32.gmra.mrb[0].mxu0 %v649
        %v722 = vpop.f32.mrb[0].mxu0
        %v723 = vadd.f32 %v642, %v722
        %v724 = vpop.f32.mrb[0].mxu0
        %725 = vdwg.mxu0
        %v726 = vpack.c.bf16 %v723, %v718
        %v727 = vld [vmem:[#allocation2] sm:$0xff]
        %v728 = vld [vmem:[#allocation2 + $0x8] sm:$0xff]
        %v729 = vld [vmem:[#allocation2 + $0x10] sm:$0xff]
        %730 = vxpose.xlu0.c.b16.start [1/8] %v726, 128
        %731 = vxpose.xlu0.c.b16.cont [2/8] 0, 128
        %732 = vxpose.xlu0.c.b16.cont [3/8] 0, 128
        %733 = vxpose.xlu0.c.b16.cont [4/8] 0, 128
        %734 = vxpose.xlu0.c.b16.cont [5/8] 0, 128
        %735 = vxpose.xlu0.c.b16.cont [6/8] 0, 128
        %736 = vxpose.xlu0.c.b16.cont [7/8] 0, 128
        %737 = vxpose.xlu0.c.b16.end [8/8] 0, 128
        %v738 = vpop.trf.xlu0
        %v739 = vpop.trf.xlu0
        %v740 = vpop.trf.xlu0
        %v741 = vpop.trf.xlu0
        %v742 = vpop.trf.xlu0
        %v743 = vpop.trf.xlu0
        %v744 = vpop.trf.xlu0
        %v745 = vpop.trf.xlu0
        %vm746 = vcmask 130048
        %v748 = vsel %vm746, %v738, 0
        %v751 = vsel %vm746, %v739, 0
        %v754 = vsel %vm746, %v740, 0
        %v757 = vsel %vm746, %v741, 0
        %759 = vmatprep.subr.bf16.mxu0 0
        %760 = vmatpush1.bf16.msra.mxu0 %v727
        %761 = vmatprep.subr.bf16.mxu0 0
        %762 = vmatpush1.bf16.msra.mxu0 0
        %763 = vmatprep.subr.bf16.mxu0 0
        %764 = vmatpush1.bf16.msra.mxu0 0
        %765 = vmatprep.subr.bf16.mxu0 0
        %766 = vmatpush1.bf16.msra.mxu0 0
        %767 = vmatprep.subr.bf16.mxu0 0
        %768 = vmatpush1.bf16.msra.mxu0 0
        %769 = vmatprep.subr.bf16.mxu0 0
        %770 = vmatpush1.bf16.msra.mxu0 0
        %771 = vmatprep.subr.bf16.mxu0 0
        %772 = vmatpush1.bf16.msra.mxu0 0
        %773 = vmatprep.subr.bf16.mxu0 0
        %774 = vmatpush1.bf16.msra.mxu0 0
        %775 = vmatprep.subr.bf16.mxu0 0
        %776 = vmatpush1.bf16.msra.mxu0 0
        %777 = vmatprep.subr.bf16.mxu0 0
        %778 = vmatpush1.bf16.msra.mxu0 0
        %779 = vmatprep.subr.bf16.mxu0 0
        %780 = vmatpush1.bf16.msra.mxu0 0
        %781 = vmatprep.subr.bf16.mxu0 0
        %782 = vmatpush1.bf16.msra.mxu0 0
        %783 = vmatprep.subr.bf16.mxu0 0
        %784 = vmatpush1.bf16.msra.mxu0 0
        %785 = vmatprep.subr.bf16.mxu0 0
        %786 = vmatpush1.bf16.msra.mxu0 0
        %787 = vmatprep.subr.bf16.mxu0 0
        %788 = vmatpush1.bf16.msra.mxu0 0
        %789 = vmatprep.subr.bf16.mxu0 0
        %790 = vmatpush1.bf16.msra.mxu0 0
        %791 = vmatprep.mubr.bf16.mxu0 0
        %792 = vmatmul.mubr.bf16.gmra.mrb[0].mxu0 %v748
        %v793 = vpop.f32.mrb[0].mxu0
        %v794 = vadd.f32 0.0, %v793
        %v795 = vpop.f32.mrb[0].mxu0
        %v796 = vpop.f32.mrb[0].mxu0
        %v797 = vadd.f32 0.0, %v796
        %v798 = vpop.f32.mrb[0].mxu0
        %799 = vmatprep.mubr.bf16.mxu0 0
        %800 = vmatmul.mubr.bf16.gmra.mrb[0].mxu0 %v751
        %v801 = vpop.f32.mrb[0].mxu0
        %v802 = vadd.f32 0.0, %v801
        %v803 = vpop.f32.mrb[0].mxu0
        %v804 = vpop.f32.mrb[0].mxu0
        %v805 = vadd.f32 0.0, %v804
        %v806 = vpop.f32.mrb[0].mxu0
        %807 = vmatprep.mubr.bf16.mxu0 0
        %808 = vmatmul.mubr.bf16.gmra.mrb[0].mxu0 %v754
        %v809 = vpop.f32.mrb[0].mxu0
        %v810 = vadd.f32 0.0, %v809
        %v811 = vpop.f32.mrb[0].mxu0
        %v812 = vpop.f32.mrb[0].mxu0
        %v813 = vadd.f32 0.0, %v812
        %v814 = vpop.f32.mrb[0].mxu0
        %815 = vmatprep.mubr.bf16.mxu0 0
        %816 = vmatmul.mubr.bf16.gmra.mrb[0].mxu0 %v757
        %v817 = vpop.f32.mrb[0].mxu0
        %v818 = vadd.f32 0.0, %v817
        %v819 = vpop.f32.mrb[0].mxu0
        %v820 = vpop.f32.mrb[0].mxu0
        %v821 = vadd.f32 0.0, %v820
        %v822 = vpop.f32.mrb[0].mxu0
        %823 = vdwg.mxu0
        %vm824 = vcmask 523264
        %v825 = vsel %vm824, %v794, -inf
        %826 = vmax.xlane.f32.xlu0 %v825
        %v827 = vpop.xlane.xlu0 %826
        %v828 = vsel %vm824, %v797, -inf
        %829 = vmax.xlane.f32.xlu0 %v828
        %v830 = vpop.xlane.xlu0 %829
        %v831 = vsel %vm824, %v802, -inf
        %832 = vmax.xlane.f32.xlu0 %v831
        %v833 = vpop.xlane.xlu0 %832
        %v834 = vsel %vm824, %v805, -inf
        %835 = vmax.xlane.f32.xlu0 %v834
        %v836 = vpop.xlane.xlu0 %835
        %v837 = vsel %vm824, %v810, -inf
        %838 = vmax.xlane.f32.xlu0 %v837
        %v839 = vpop.xlane.xlu0 %838
        %v840 = vsel %vm824, %v813, -inf
        %841 = vmax.xlane.f32.xlu0 %v840
        %v842 = vpop.xlane.xlu0 %841
        %v843 = vsel %vm824, %v818, -inf
        %844 = vmax.xlane.f32.xlu0 %v843
        %v845 = vpop.xlane.xlu0 %844
        %v846 = vsel %vm824, %v821, -inf
        %847 = vmax.xlane.f32.xlu0 %v846
        %v848 = vpop.xlane.xlu0 %847
        %v849 = vsub.f32 %v794, %v827
        %v850 = vsub.f32 %v797, %v830
        %v851 = vsub.f32 %v802, %v833
        %v852 = vsub.f32 %v805, %v836
        %v853 = vsub.f32 %v810, %v839
        %v854 = vsub.f32 %v813, %v842
        %v855 = vsub.f32 %v818, %v845
        %v856 = vsub.f32 %v821, %v848
        %v857 = vmul.f32 %v849, 1.442695
        %v858 = vpow.pop %v857
        %v859 = vmul.f32 %v850, 1.442695
        %v860 = vpow.pop %v859
        %v861 = vmul.f32 %v851, 1.442695
        %v862 = vpow.pop %v861
        %v863 = vmul.f32 %v852, 1.442695
        %v864 = vpow.pop %v863
        %v865 = vmul.f32 %v853, 1.442695
        %v866 = vpow.pop %v865
        %v867 = vmul.f32 %v854, 1.442695
        %v868 = vpow.pop %v867
        %v869 = vmul.f32 %v855, 1.442695
        %v870 = vpow.pop %v869
        %v871 = vmul.f32 %v856, 1.442695
        %v872 = vpow.pop %v871
        %v873 = vsel %vm824, %v858, 0.0
        %874 = vadd.xlane.f32.xlu0 %v873
        %v875 = vpop.xlane.xlu0 %874
        %v876 = vsel %vm824, %v860, 0.0
        %877 = vadd.xlane.f32.xlu0 %v876
        %v878 = vpop.xlane.xlu0 %877
        %v879 = vsel %vm824, %v862, 0.0
        %880 = vadd.xlane.f32.xlu0 %v879
        %v881 = vpop.xlane.xlu0 %880
        %v882 = vsel %vm824, %v864, 0.0
        %883 = vadd.xlane.f32.xlu0 %v882
        %v884 = vpop.xlane.xlu0 %883
        %v885 = vsel %vm824, %v866, 0.0
        %886 = vadd.xlane.f32.xlu0 %v885
        %v887 = vpop.xlane.xlu0 %886
        %v888 = vsel %vm824, %v868, 0.0
        %889 = vadd.xlane.f32.xlu0 %v888
        %v890 = vpop.xlane.xlu0 %889
        %v891 = vsel %vm824, %v870, 0.0
        %892 = vadd.xlane.f32.xlu0 %v891
        %v893 = vpop.xlane.xlu0 %892
        %v894 = vsel %vm824, %v872, 0.0
        %895 = vadd.xlane.f32.xlu0 %v894
        %v896 = vpop.xlane.xlu0 %895
        %v897 = vrcp.pop %v875
        %v898 = vrcp.pop %v878
        %v899 = vrcp.pop %v881
        %v900 = vrcp.pop %v884
        %v901 = vrcp.pop %v887
        %v902 = vrcp.pop %v890
        %v903 = vrcp.pop %v893
        %v904 = vrcp.pop %v896
        %v905 = vmul.f32 %v858, %v897
        %v906 = vmul.f32 %v860, %v898
        %v907 = vmul.f32 %v862, %v899
        %v908 = vmul.f32 %v864, %v900
        %v909 = vmul.f32 %v866, %v901
        %v910 = vmul.f32 %v868, %v902
        %v911 = vmul.f32 %v870, %v903
        %v912 = vmul.f32 %v872, %v904
        %v913 = vpack.c.bf16 %v906, %v905
        %v914 = vpack.c.bf16 %v908, %v907
        %v915 = vpack.c.bf16 %v910, %v909
        %v916 = vpack.c.bf16 %v912, %v911
        %v918 = vsel %vm824, %v728, 0
        %v921 = vsel %vm824, %v729, 0
        %v924 = vsel %vm824, %v913, 0
        %v927 = vsel %vm824, %v914, 0
        %v930 = vsel %vm824, %v915, 0
        %v933 = vsel %vm824, %v916, 0
        %935 = vmatprep.subr.bf16.mxu0 0
        %936 = vmatpush1.bf16.xpose.msra.mxu0 %v924
        %937 = vmatprep.subr.bf16.mxu0 0
        %938 = vmatpush1.bf16.xpose.msra.mxu0 %v927
        %939 = vmatprep.subr.bf16.mxu0 0
        %940 = vmatpush1.bf16.xpose.msra.mxu0 %v930
        %941 = vmatprep.subr.bf16.mxu0 0
        %942 = vmatpush1.bf16.xpose.msra.mxu0 %v933
        %943 = vmatprep.subr.bf16.mxu0 0
        %944 = vmatpush1.bf16.xpose.msra.mxu0 0
        %945 = vmatprep.subr.bf16.mxu0 0
        %946 = vmatpush1.bf16.xpose.msra.mxu0 0
        %947 = vmatprep.subr.bf16.mxu0 0
        %948 = vmatpush1.bf16.xpose.msra.mxu0 0
        %949 = vmatprep.subr.bf16.mxu0 0
        %950 = vmatpush1.bf16.xpose.msra.mxu0 0
        %951 = vmatprep.subr.bf16.mxu0 0
        %952 = vmatpush1.bf16.xpose.msra.mxu0 0
        %953 = vmatprep.subr.bf16.mxu0 0
        %954 = vmatpush1.bf16.xpose.msra.mxu0 0
        %955 = vmatprep.subr.bf16.mxu0 0
        %956 = vmatpush1.bf16.xpose.msra.mxu0 0
        %957 = vmatprep.subr.bf16.mxu0 0
        %958 = vmatpush1.bf16.xpose.msra.mxu0 0
        %959 = vmatprep.subr.bf16.mxu0 0
        %960 = vmatpush1.bf16.xpose.msra.mxu0 0
        %961 = vmatprep.subr.bf16.mxu0 0
        %962 = vmatpush1.bf16.xpose.msra.mxu0 0
        %963 = vmatprep.subr.bf16.mxu0 0
        %964 = vmatpush1.bf16.xpose.msra.mxu0 0
        %965 = vmatprep.subr.bf16.mxu0 0
        %966 = vmatpush1.bf16.xpose.msra.mxu0 0
        %967 = vmatprep.mubr.bf16.mxu0 0
        %968 = vmatmul.mubr.bf16.gmra.mrb[0].mxu0 %v918
        %v969 = vpop.f32.mrb[0].mxu0
        %v970 = vadd.f32 0.0, %v969
        %v971 = vpop.f32.mrb[0].mxu0
        %v972 = vpop.f32.mrb[0].mxu0
        %v973 = vadd.f32 0.0, %v972
        %v974 = vpop.f32.mrb[0].mxu0
        %975 = vmatprep.mubr.bf16.mxu0 0
        %976 = vmatmul.mubr.bf16.gmra.mrb[0].mxu0 %v921
        %v977 = vpop.f32.mrb[0].mxu0
        %v978 = vadd.f32 0.0, %v977
        %v979 = vpop.f32.mrb[0].mxu0
        %v980 = vpop.f32.mrb[0].mxu0
        %v981 = vadd.f32 0.0, %v980
        %v982 = vpop.f32.mrb[0].mxu0
        %983 = vdwg.mxu0
        %s984 = sld [smem:[#allocation3]]
        %v985 = vstv %s984
        %v986 = vmul.f32 %v985, %v970
        %v987 = vmul.f32 %v985, %v973
        %v988 = vmul.f32 %v985, %v978
        %v989 = vmul.f32 %v985, %v981
        %v990 = vadd.f32 %v626, %v986
        %v991 = vadd.f32 %v627, %v987
        %v992 = vadd.f32 %v628, %v988
        %v993 = vadd.f32 %v629, %v989
        %994 = vst.msk [vmem:[%s445] sm:$0xff] %vm824, %v990
        %995 = vst.msk [vmem:[%s445 + $0x8] sm:$0xff] %vm824, %v991
        %996 = vst.msk [vmem:[%s445 + $0x10] sm:$0xff] %vm824, %v992
        %997 = vst.msk [vmem:[%s445 + $0x18] sm:$0xff] %vm824, %v993
        %998 = vst.msk [vmem:[%s452] sm:$0xff] %vm824, %v905
        %999 = vst.msk [vmem:[%s452 + $0x8] sm:$0xff] %vm824, %v906
        %1000 = vst.msk [vmem:[%s452 + $0x10] sm:$0xff] %vm824, %v907
        %1001 = vst.msk [vmem:[%s452 + $0x18] sm:$0xff] %vm824, %v908
        %1002 = vst.msk [vmem:[%s452 + $0x20] sm:$0xff] %vm824, %v909
        %1003 = vst.msk [vmem:[%s452 + $0x28] sm:$0xff] %vm824, %v910
        %1004 = vst.msk [vmem:[%s452 + $0x30] sm:$0xff] %vm824, %v911
        %1005 = vst.msk [vmem:[%s452 + $0x38] sm:$0xff] %vm824, %v912
        %s1006 = sand.u32 %s216, 1
        %s1007 = scalar_lea.sflag [#allocation6], %s1006
        %s1008 = sand.u32 %s216, 1
        %s1009 = smul.addr %s1008, 32
        %s1010 = scalar_lea.vmem [#allocation15], %s1009
        %s1011 = sand.u32 %s244, 1
        %s1012 = scalar_lea.sflag [#allocation17], %s1011
        %s1013 = sand.u32 %s244, 1
        %s1014 = smul.addr %s1013, 64
        %s1015 = scalar_lea.vmem [#allocation16], %s1014
        // Predicated region
        $region77: #{self_attention_pallas.1} parent=47 // pred_check
          %p1016 = pneg %p226
        $region78: #{self_attention_pallas.1} parent=47 // pred_check_branch
          %1018 = sbr.rel (%p1016) target = $region80
        $region79: #{self_attention_pallas.1} parent=47 // pred_region
          %s1020 = ssub.s32 512, 512
          %1021 = vsyncadd %s1007, %s1020
          %s1022 = smul.addr %s39, 4
          %s1023 = sadd.s32 %s40, %s1022
          %s1024 = smul.addr %s1023, 128
          %s1025 = scalar_lea.hbm %s7, %s1024
          %s1026 = sshll.u32 %s1010, 4
          %s1027 = int_to_ptr.vmem [resolvable:$true] %s1026
          %1032 = dma.vmem_to_hbm [thread:$0]  %s1027, 512, %s1025, %s1007, 128, 128, 8
        $region80: #{self_attention_pallas.1} parent=47 // pred_fallthru
          _
        // Predicated region
        $region81: #{self_attention_pallas.1} parent=47 // pred_check
          %p1033 = pneg %p254
        $region82: #{self_attention_pallas.1} parent=47 // pred_check_branch
          %1035 = sbr.rel (%p1033) target = $region84
        $region83: #{self_attention_pallas.1} parent=47 // pred_region
          %s1036 = smul.u32 8, %s40
          %s1038 = ssub.s32 1024, 1024
          %1039 = vsyncadd %s1012, %s1038
          %s1040 = smul.addr %s39, 8
          %s1041 = sadd.s32 %s1036, %s1040
          %s1042 = smul.addr %s1041, 128
          %s1043 = scalar_lea.hbm %s8, %s1042
          %s1044 = sshll.u32 %s1015, 4
          %s1045 = int_to_ptr.vmem [resolvable:$true] %s1044
          %1050 = dma.vmem_to_hbm [thread:$0]  %s1045, 1024, %s1043, %s1012, 128, 128, 8
        $region84: #{self_attention_pallas.1} parent=47 // pred_fallthru
          _
      $region48: #{self_attention_pallas.1} parent=5 // pred_fallthru
        _
      %p1051 = scmp.le.s32.totalorder 2, %s30
      // Predicated region
      $region85: #{self_attention_pallas.1} parent=5 // pred_check
        %p1052 = pneg %p1051
      $region86: #{self_attention_pallas.1} parent=5 // pred_check_branch
        %1054 = sbr.rel (%p1052) target = $region88
      $region87: #{self_attention_pallas.1} parent=5 // pred_region
        %s1055 = ssub.s32 %s30, 2
        // Predicated region
        $region89: #{self_attention_pallas.1} parent=87 // pred_check
          %p1056 = pneg %p232
        $region90: #{self_attention_pallas.1} parent=87 // pred_check_branch
          %1058 = sbr.rel (%p1056) target = $region92
        $region91: #{self_attention_pallas.1} parent=87 // pred_region
          %s1059 = sand.u32 %s217, 1
          %s1060 = scalar_lea.sflag [#allocation6], %s1059
          %s1061 = sand.u32 %s217, 1
          %s1062 = smul.addr %s1061, 32
          %s1063 = scalar_lea.vmem [#allocation15], %s1062
          %1064 = dma.done %s1060, 512
        $region92: #{self_attention_pallas.1} parent=87 // pred_fallthru
          _
        // Predicated region
        $region93: #{self_attention_pallas.1} parent=87 // pred_check
          %p1065 = pneg %p260
        $region94: #{self_attention_pallas.1} parent=87 // pred_check_branch
          %1067 = sbr.rel (%p1065) target = $region96
        $region95: #{self_attention_pallas.1} parent=87 // pred_region
          %s1068 = sand.u32 %s245, 1
          %s1069 = scalar_lea.sflag [#allocation17], %s1068
          %s1070 = sand.u32 %s245, 1
          %s1071 = smul.addr %s1070, 64
          %s1072 = scalar_lea.vmem [#allocation16], %s1071
          %1073 = dma.done %s1069, 1024
        $region96: #{self_attention_pallas.1} parent=87 // pred_fallthru
          _
      $region88: #{self_attention_pallas.1} parent=5 // pred_fallthru
        _
    $region6: #{self_attention_pallas.1} parent=1 // loop_footer
      %s34 = sadd.s32 1, %s30
    $region7: #{self_attention_pallas.1} parent=1 // loop_footer_branch
      %29 = sbr.rel target = $region3
    $region8: #{self_attention_pallas.1} parent=1 // loop_exit
      _
    %1074 = vsyncpa [#allocation5], 1
    %s1075 = scalar_lea.sflag [#allocation5], 1
    %1076 = vsyncpa %s1075, 1
    %1077 = vsyncpa [#allocation8], 1
    %s1078 = scalar_lea.sflag [#allocation8], 1
    %1079 = vsyncpa %s1078, 1
    %1080 = vsyncpa [#allocation11], 1
    %1081 = vsyncpa [#allocation14], 1
    %1082 = vsyncpa [#allocation6], 1
    %s1083 = scalar_lea.sflag [#allocation6], 1
    %1084 = vsyncpa %s1083, 1
    %1085 = vsyncpa [#allocation17], 1
    %s1086 = scalar_lea.sflag [#allocation17], 1
    %1087 = vsyncpa %s1086, 1

</llo_original>
